<compile_context>
chip_gen: v6e
topology: v6e:2x2x1
jax: 0.10.0
libtpu: 0.0.40
codegen_flags: <defaults>
</compile_context>

<pallas_src>
import functools

import jax
import jax.numpy as jnp
from jax.experimental import pallas as pl
from jax.experimental.pallas import tpu as pltpu

EPS = 1e-5  # torch.nn.BatchNorm1d default eps


def _gnn_fused_kernel(a_ref, x_ref, w1_ref, aff1_ref, w2_ref, aff2_ref, o_ref):
    """Fused 2-layer GCN forward.

    aff*_ref is a packed (3, F) array: row 0 = conv bias, row 1 = BN scale,
    row 2 = BN shift (scale = gamma*rsqrt(var+eps), shift = beta - mean*scale).
    """
    a = a_ref[...]  # A_hat stays resident for both matmul chains

    # ---- layer 1: (A @ X) @ W1  (contract at the narrower feature width first)
    ax = jnp.dot(a, x_ref[...], preferred_element_type=jnp.float32)
    h = jnp.dot(ax, w1_ref[...], preferred_element_type=jnp.float32)
    h = h + aff1_ref[0:1, :]                        # conv1 bias
    h = jnp.maximum(h, 0.0)                         # ReLU
    h = h * aff1_ref[1:2, :] + aff1_ref[2:3, :]     # folded BN1 (eval mode)
    # dropout (eval) == identity; h stays in vregs -- no HBM round trip

    # ---- layer 2: A @ (H @ W2)  (contract at the narrower feature width first)
    hw = jnp.dot(h, w2_ref[...], preferred_element_type=jnp.float32)
    g = jnp.dot(a, hw, preferred_element_type=jnp.float32)
    g = g + aff2_ref[0:1, :]                        # conv2 bias
    g = jnp.maximum(g, 0.0)                         # ReLU
    o_ref[...] = (g * aff2_ref[1:2, :] + aff2_ref[2:3, :]).astype(o_ref.dtype)


def gnn_fused(a_hat, x, w1, aff1, w2, aff2):
    """Single pallas_call; whole problem fits in VMEM at these shapes."""
    n, f_in = x.shape
    f_hidden = w1.shape[1]
    f_out = w2.shape[1]

    def full(shape):
        return pl.BlockSpec(shape, lambda: (0,) * len(shape))

    return pl.pallas_call(
        _gnn_fused_kernel,
        out_shape=jax.ShapeDtypeStruct((n, f_out), jnp.float32),
        grid=(),
        in_specs=[
            full((n, n)),            # A_hat (DMA'd once, used by both layers)
            full((n, f_in)),         # X
            full((f_in, f_hidden)),  # W1
            full((3, f_hidden)),     # packed bias/scale/shift, layer 1
            full((f_hidden, f_out)),  # W2
            full((3, f_out)),        # packed bias/scale/shift, layer 2
        ],
        out_specs=full((n, f_out)),
        compiler_params=pltpu.CompilerParams(vmem_limit_bytes=32 * 1024 * 1024),
    )(a_hat, x, w1, aff1, w2, aff2)


def build_norm_adj(edge_index, edge_attr, num_nodes):
    """Densify edges + self-loops with GCN symmetric normalization.

    Uses a one-hot matmul (MXU) instead of a serialized XLA scatter.
    """
    src = edge_index[0]
    dst = edge_index[1]
    w = edge_attr.astype(jnp.float32)
    oh_dst = jax.nn.one_hot(dst, num_nodes, dtype=jnp.float32)   # (E, N)
    oh_src = jax.nn.one_hot(src, num_nodes, dtype=jnp.float32)   # (E, N)
    a = oh_dst.T @ (w[:, None] * oh_src)                         # A[d, s] = sum_e w_e
    a = a + jnp.eye(num_nodes, dtype=jnp.float32)                # self-loops, weight 1
    deg = jnp.sum(a, axis=1)                                     # weighted in-degree
    d_inv_sqrt = jnp.where(deg > 0, jax.lax.rsqrt(deg), 0.0)
    return d_inv_sqrt[:, None] * a * d_inv_sqrt[None, :]


class GNNParams:
    """Deterministic parameter initialization matching the torch module shapes."""

    def __init__(self, key, in_dim, hidden_dim):
        keys = jax.random.split(key, 4)
        s1 = 1.0 / jnp.sqrt(jnp.float32(in_dim))
        s2 = 1.0 / jnp.sqrt(jnp.float32(hidden_dim))
        # GCNConv weights (lin: in -> out) and biases
        self.w1 = jax.random.uniform(keys[0], (in_dim, hidden_dim),
                                     jnp.float32, -s1, s1)
        self.b1 = jnp.zeros((1, hidden_dim), jnp.float32)
        self.w2 = jax.random.uniform(keys[1], (hidden_dim, in_dim),
                                     jnp.float32, -s2, s2)
        self.b2 = jnp.zeros((1, in_dim), jnp.float32)
        # BatchNorm1d: gamma, beta, running stats (deterministic, non-trivial)
        self.g1 = jnp.ones((1, hidden_dim), jnp.float32)
        self.be1 = jnp.zeros((1, hidden_dim), jnp.float32)
        self.rm1 = 0.1 * jax.random.normal(keys[2], (1, hidden_dim), jnp.float32)
        self.rv1 = jnp.ones((1, hidden_dim), jnp.float32) * 1.5
        self.g2 = jnp.ones((1, in_dim), jnp.float32)
        self.be2 = jnp.zeros((1, in_dim), jnp.float32)
        self.rm2 = 0.1 * jax.random.normal(keys[3], (1, in_dim), jnp.float32)
        self.rv2 = jnp.ones((1, in_dim), jnp.float32) * 0.75


@functools.partial(jax.jit, static_argnums=(4,))
def gnn_forward(x, edge_index, edge_attr, params_flat, num_nodes):
    (w1, b1, g1, be1, rm1, rv1, w2, b2, g2, be2, rm2, rv2) = params_flat
    a_hat = build_norm_adj(edge_index, edge_attr, num_nodes)
    # Fold BN into scale/shift and pack (bias, scale, shift) -> (3, F) per layer
    sc1 = g1 * jax.lax.rsqrt(rv1 + EPS)
    sh1 = be1 - rm1 * sc1
    aff1 = jnp.concatenate([b1, sc1, sh1], axis=0)     # (3, hidden_dim)
    sc2 = g2 * jax.lax.rsqrt(rv2 + EPS)
    sh2 = be2 - rm2 * sc2
    aff2 = jnp.concatenate([b2, sc2, sh2], axis=0)     # (3, in_dim)
    return gnn_fused(a_hat, x, w1, aff1, w2, aff2)


def reference_forward(x, edge_index, edge_attr, params_flat, num_nodes):
    """Pure-JAX reference (independent scatter-based adjacency build)."""
    (w1, b1, g1, be1, rm1, rv1, w2, b2, g2, be2, rm2, rv2) = params_flat
    src = edge_index[0]
    dst = edge_index[1]
    a = jnp.zeros((num_nodes, num_nodes), jnp.float32)
    a = a.at[dst, src].add(edge_attr.astype(jnp.float32))
    a = a + jnp.eye(num_nodes, dtype=jnp.float32)
    deg = jnp.sum(a, axis=1)
    d_inv_sqrt = jnp.where(deg > 0, jax.lax.rsqrt(deg), 0.0)
    a_hat = d_inv_sqrt[:, None] * a * d_inv_sqrt[None, :]

    def layer(aa, xx, w, b, g, be, rm, rv):
        h = aa @ (xx @ w) + b
        h = jnp.maximum(h, 0.0)
        return g * (h - rm) / jnp.sqrt(rv + EPS) + be

    h = layer(a_hat, x, w1, b1, g1, be1, rm1, rv1)
    return layer(a_hat, h, w2, b2, g2, be2, rm2, rv2)


if __name__ == "__main__":
    NUM_NODES = 64
    IN_DIM = 16
    HIDDEN_DIM = 32
    NUM_EDGES = 256

    key = jax.random.PRNGKey(0)
    k_x, k_src, k_dst, k_w, k_params = jax.random.split(key, 5)

    x = jax.random.normal(k_x, (NUM_NODES, IN_DIM), jnp.float32)
    src = jax.random.randint(k_src, (NUM_EDGES,), 0, NUM_NODES, jnp.int32)
    dst = jax.random.randint(k_dst, (NUM_EDGES,), 0, NUM_NODES, jnp.int32)
    edge_index = jnp.stack([src, dst], axis=0)                   # (2, E)
    edge_attr = jax.random.uniform(k_w, (NUM_EDGES,), jnp.float32, 0.1, 1.0)

    p = GNNParams(k_params, IN_DIM, HIDDEN_DIM)
    params_flat = (p.w1, p.b1, p.g1, p.be1, p.rm1, p.rv1,
                   p.w2, p.b2, p.g2, p.be2, p.rm2, p.rv2)

    out = gnn_forward(x, edge_index, edge_attr, params_flat, NUM_NODES)
    out = jax.block_until_ready(out)

    ref = reference_forward(x, edge_index, edge_attr, params_flat, NUM_NODES)
    assert out.shape == (NUM_NODES, IN_DIM)
    assert jnp.allclose(out, ref, atol=1e-4, rtol=1e-4), "mismatch vs reference"

    print("KERNEL_OK")
</pallas_src>

<mosaic_0001>
module attributes {stable_mosaic.version = 11 : i64} {
  func.func @_gnn_fused_kernel(%arg0: memref<64x64xf32, #tpu.memory_space<vmem>>, %arg1: memref<64x16xf32, #tpu.memory_space<vmem>>, %arg2: memref<16x32xf32, #tpu.memory_space<vmem>>, %arg3: memref<3x32xf32, #tpu.memory_space<vmem>>, %arg4: memref<32x16xf32, #tpu.memory_space<vmem>>, %arg5: memref<3x16xf32, #tpu.memory_space<vmem>>, %arg6: memref<64x16xf32, #tpu.memory_space<vmem>>) attributes {dimension_semantics = [], scalar_prefetch = 0 : i64, scratch_operands = 0 : i64, tpu.core_type = #tpu.core_type<tc>} {
    %c0 = arith.constant 0 : index
    %c0_0 = arith.constant 0 : index
    %0 = vector.load %arg0[%c0, %c0_0] : memref<64x64xf32, #tpu.memory_space<vmem>>, vector<64x64xf32>
    %c0_1 = arith.constant 0 : index
    %c0_2 = arith.constant 0 : index
    %1 = vector.load %arg1[%c0_1, %c0_2] : memref<64x16xf32, #tpu.memory_space<vmem>>, vector<64x16xf32>
    %cst = arith.constant dense<0.000000e+00> : vector<64x16xf32>
    %2 = tpu.matmul %0, %1, %cst {dimension_numbers = #tpu.dot_dimension_numbers<[1], [0], [0], [1], [0, 0, 1, 1], [], []>} : vector<64x64xf32>, vector<64x16xf32>, vector<64x16xf32> -> vector<64x16xf32>
    %c0_3 = arith.constant 0 : index
    %c0_4 = arith.constant 0 : index
    %3 = vector.load %arg2[%c0_3, %c0_4] : memref<16x32xf32, #tpu.memory_space<vmem>>, vector<16x32xf32>
    %cst_5 = arith.constant dense<0.000000e+00> : vector<64x32xf32>
    %4 = tpu.matmul %2, %3, %cst_5 {dimension_numbers = #tpu.dot_dimension_numbers<[1], [0], [0], [1], [0, 0, 1, 1], [], []>} : vector<64x16xf32>, vector<16x32xf32>, vector<64x32xf32> -> vector<64x32xf32>
    %c0_6 = arith.constant 0 : index
    %c0_7 = arith.constant 0 : index
    %5 = vector.load %arg3[%c0_6, %c0_7] : memref<3x32xf32, #tpu.memory_space<vmem>>, vector<1x32xf32>
    %6 = vector.broadcast %5 : vector<1x32xf32> to vector<64x32xf32>
    %7 = arith.addf %4, %6 : vector<64x32xf32>
    %cst_8 = arith.constant 0.000000e+00 : f32
    %8 = vector.broadcast %cst_8 : f32 to vector<64x32xf32>
    %9 = arith.maximumf %7, %8 : vector<64x32xf32>
    %c1 = arith.constant 1 : index
    %c0_9 = arith.constant 0 : index
    %10 = vector.load %arg3[%c1, %c0_9] : memref<3x32xf32, #tpu.memory_space<vmem>>, vector<1x32xf32>
    %11 = vector.broadcast %10 : vector<1x32xf32> to vector<64x32xf32>
    %12 = arith.mulf %9, %11 : vector<64x32xf32>
    %c2 = arith.constant 2 : index
    %c0_10 = arith.constant 0 : index
    %13 = vector.load %arg3[%c2, %c0_10] : memref<3x32xf32, #tpu.memory_space<vmem>>, vector<1x32xf32>
    %14 = vector.broadcast %13 : vector<1x32xf32> to vector<64x32xf32>
    %15 = arith.addf %12, %14 : vector<64x32xf32>
    %c0_11 = arith.constant 0 : index
    %c0_12 = arith.constant 0 : index
    %16 = vector.load %arg4[%c0_11, %c0_12] : memref<32x16xf32, #tpu.memory_space<vmem>>, vector<32x16xf32>
    %cst_13 = arith.constant dense<0.000000e+00> : vector<64x16xf32>
    %17 = tpu.matmul %15, %16, %cst_13 {dimension_numbers = #tpu.dot_dimension_numbers<[1], [0], [0], [1], [0, 0, 1, 1], [], []>} : vector<64x32xf32>, vector<32x16xf32>, vector<64x16xf32> -> vector<64x16xf32>
    %cst_14 = arith.constant dense<0.000000e+00> : vector<64x16xf32>
    %18 = tpu.matmul %0, %17, %cst_14 {dimension_numbers = #tpu.dot_dimension_numbers<[1], [0], [0], [1], [0, 0, 1, 1], [], []>} : vector<64x64xf32>, vector<64x16xf32>, vector<64x16xf32> -> vector<64x16xf32>
    %c0_15 = arith.constant 0 : index
    %c0_16 = arith.constant 0 : index
    %19 = vector.load %arg5[%c0_15, %c0_16] : memref<3x16xf32, #tpu.memory_space<vmem>>, vector<1x16xf32>
    %20 = vector.broadcast %19 : vector<1x16xf32> to vector<64x16xf32>
    %21 = arith.addf %18, %20 : vector<64x16xf32>
    %cst_17 = arith.constant 0.000000e+00 : f32
    %22 = vector.broadcast %cst_17 : f32 to vector<64x16xf32>
    %23 = arith.maximumf %21, %22 : vector<64x16xf32>
    %c1_18 = arith.constant 1 : index
    %c0_19 = arith.constant 0 : index
    %24 = vector.load %arg5[%c1_18, %c0_19] : memref<3x16xf32, #tpu.memory_space<vmem>>, vector<1x16xf32>
    %25 = vector.broadcast %24 : vector<1x16xf32> to vector<64x16xf32>
    %26 = arith.mulf %23, %25 : vector<64x16xf32>
    %c2_20 = arith.constant 2 : index
    %c0_21 = arith.constant 0 : index
    %27 = vector.load %arg5[%c2_20, %c0_21] : memref<3x16xf32, #tpu.memory_space<vmem>>, vector<1x16xf32>
    %28 = vector.broadcast %27 : vector<1x16xf32> to vector<64x16xf32>
    %29 = arith.addf %26, %28 : vector<64x16xf32>
    %c0_22 = arith.constant 0 : index
    %c0_23 = arith.constant 0 : index
    %30 = vector.load %arg6[%c0_22, %c0_23] : memref<64x16xf32, #tpu.memory_space<vmem>>, vector<64x16xf32>
    tpu.vector_store %arg6[%c0_22, %c0_23], %29 {strides = array<i32>} : memref<64x16xf32, #tpu.memory_space<vmem>>, vector<64x16xf32>,
    return
  }
}

</mosaic_0001>

<llo_original>
// kernel: gnn_forward.1
$region0: #{gnn_forward.1}
  #allocation0 [shape = 'u32[]', space=smem, size = 0x4, offset = 0x4, fixed_abs, tag = 'smem constant byte address 0x4 - core index']
  #allocation1 [shape = 'u32[144,128]{1,0:T(1,128)}', space=vmem, size = 0x12000, scoped, tag = 'internal scratch']
  %s0 = inlined_call_operand.vmem [shape: f32[64,64], index: 0, kind: input, shape index: {}]
  %s1 = inlined_call_operand.vmem [shape: f32[64,16], index: 1, kind: input, shape index: {}]
  %s2 = inlined_call_operand.vmem [shape: f32[16,32], index: 2, kind: input, shape index: {}]
  %s3 = inlined_call_operand.vmem [shape: f32[3,32], index: 3, kind: input, shape index: {}]
  %s4 = inlined_call_operand.vmem [shape: f32[32,16], index: 4, kind: input, shape index: {}]
  %s5 = inlined_call_operand.vmem [shape: f32[3,16], index: 5, kind: input, shape index: {}]
  %s6 = inlined_call_operand.vmem [shape: f32[64,16], index: 6, kind: output, shape index: {}]
  %s7 = sld [smem:[#allocation0]]
  $region34: #{gnn_forward.1} parent=0
    _
  %s9 = ssub.s32 1, %s7
  %s10 = scalar_select 0, %s9, %s7
  // Predicated region
  $region2: #{gnn_forward.1} parent=0 // pred_check
    _
  $region3: #{gnn_forward.1} parent=0 // pred_check_branch
    %12 = sbr.rel (0) target = $region5
  $region4: #{gnn_forward.1} parent=0 // pred_region
    _
  $region5: #{gnn_forward.1} parent=0 // pred_fallthru
    _
  // Predicated region
  $region6: #{gnn_forward.1} parent=0 // pred_check
    _
  $region7: #{gnn_forward.1} parent=0 // pred_check_branch
    %14 = sbr.rel (0) target = $region9
  $region8: #{gnn_forward.1} parent=0 // pred_region
    _
  $region9: #{gnn_forward.1} parent=0 // pred_fallthru
    _
  // Predicated region
  $region10: #{gnn_forward.1} parent=0 // pred_check
    _
  $region11: #{gnn_forward.1} parent=0 // pred_check_branch
    %16 = sbr.rel (0) target = $region13
  $region12: #{gnn_forward.1} parent=0 // pred_region
    _
  $region13: #{gnn_forward.1} parent=0 // pred_fallthru
    _
  // Predicated region
  $region14: #{gnn_forward.1} parent=0 // pred_check
    _
  $region15: #{gnn_forward.1} parent=0 // pred_check_branch
    %18 = sbr.rel (0) target = $region17
  $region16: #{gnn_forward.1} parent=0 // pred_region
    _
  $region17: #{gnn_forward.1} parent=0 // pred_fallthru
    _
  // Predicated region
  $region18: #{gnn_forward.1} parent=0 // pred_check
    _
  $region19: #{gnn_forward.1} parent=0 // pred_check_branch
    %20 = sbr.rel (0) target = $region21
  $region20: #{gnn_forward.1} parent=0 // pred_region
    _
  $region21: #{gnn_forward.1} parent=0 // pred_fallthru
    _
  // Predicated region
  $region22: #{gnn_forward.1} parent=0 // pred_check
    _
  $region23: #{gnn_forward.1} parent=0 // pred_check_branch
    %22 = sbr.rel (0) target = $region25
  $region24: #{gnn_forward.1} parent=0 // pred_region
    _
  $region25: #{gnn_forward.1} parent=0 // pred_fallthru
    _
  %v23 = vld [vmem:[%s0] sm:$0xff]
  %v24 = vld [vmem:[%s0 + $0x8] sm:$0xff]
  %v25 = vld [vmem:[%s0 + $0x10] sm:$0xff]
  %v26 = vld [vmem:[%s0 + $0x18] sm:$0xff]
  %v27 = vld [vmem:[%s0 + $0x20] sm:$0xff]
  %v28 = vld [vmem:[%s0 + $0x28] sm:$0xff]
  %v29 = vld [vmem:[%s0 + $0x30] sm:$0xff]
  %v30 = vld [vmem:[%s0 + $0x38] sm:$0xff]
  %v31 = vld [vmem:[%s1] sm:$0xff]
  %v32 = vld [vmem:[%s1 + $0x8] sm:$0xff]
  %v33 = vld [vmem:[%s1 + $0x10] sm:$0xff]
  %v34 = vld [vmem:[%s1 + $0x18] sm:$0xff]
  %v35 = vld [vmem:[%s1 + $0x20] sm:$0xff]
  %v36 = vld [vmem:[%s1 + $0x28] sm:$0xff]
  %v37 = vld [vmem:[%s1 + $0x30] sm:$0xff]
  %v38 = vld [vmem:[%s1 + $0x38] sm:$0xff]
  %vm39 = vcmask 523264
  %v41 = vsel %vm39, %v23, 0
  %v44 = vsel %vm39, %v24, 0
  %v47 = vsel %vm39, %v25, 0
  %v50 = vsel %vm39, %v26, 0
  %v53 = vsel %vm39, %v27, 0
  %v56 = vsel %vm39, %v28, 0
  %v59 = vsel %vm39, %v29, 0
  %v62 = vsel %vm39, %v30, 0
  %64 = vmatprep.subr.mxu0 0.0
  %65 = vmatpush1.msra.mxu0 0.0
  %66 = vmatprep.subr.mxu0 0.0
  %67 = vmatpush1.msra.mxu0 0.0
  %68 = vmatprep.subr.mxu0 0.0
  %69 = vmatpush1.msra.mxu0 0.0
  %70 = vmatprep.subr.mxu0 0.0
  %71 = vmatpush1.msra.mxu0 0.0
  %72 = vmatprep.subr.mxu0 0.0
  %73 = vmatpush1.msra.mxu0 0.0
  %74 = vmatprep.subr.mxu0 0.0
  %75 = vmatpush1.msra.mxu0 0.0
  %76 = vmatprep.subr.mxu0 0.0
  %77 = vmatpush1.msra.mxu0 0.0
  %78 = vmatprep.subr.mxu0 0.0
  %79 = vmatpush1.msra.mxu0 0.0
  %80 = vmatprep.subr.mxu0 0.0
  %81 = vmatpush1.msra.mxu0 %v38
  %82 = vmatprep.subr.mxu0 0.0
  %83 = vmatpush1.msra.mxu0 %v37
  %84 = vmatprep.subr.mxu0 0.0
  %85 = vmatpush1.msra.mxu0 %v36
  %86 = vmatprep.subr.mxu0 0.0
  %87 = vmatpush1.msra.mxu0 %v35
  %88 = vmatprep.subr.mxu0 0.0
  %89 = vmatpush1.msra.mxu0 %v34
  %90 = vmatprep.subr.mxu0 0.0
  %91 = vmatpush1.msra.mxu0 %v33
  %92 = vmatprep.subr.mxu0 0.0
  %93 = vmatpush1.msra.mxu0 %v32
  %94 = vmatprep.subr.mxu0 0.0
  %95 = vmatpush1.msra.mxu0 %v31
  %96 = vmatprep.subr.mxu0 0.0
  %97 = vmatpush2.msra.mxu0 0.0
  %98 = vmatprep.subr.mxu0 0.0
  %99 = vmatpush2.msra.mxu0 0.0
  %100 = vmatprep.subr.mxu0 0.0
  %101 = vmatpush2.msra.mxu0 0.0
  %102 = vmatprep.subr.mxu0 0.0
  %103 = vmatpush2.msra.mxu0 0.0
  %104 = vmatprep.subr.mxu0 0.0
  %105 = vmatpush2.msra.mxu0 0.0
  %106 = vmatprep.subr.mxu0 0.0
  %107 = vmatpush2.msra.mxu0 0.0
  %108 = vmatprep.subr.mxu0 0.0
  %109 = vmatpush2.msra.mxu0 0.0
  %110 = vmatprep.subr.mxu0 0.0
  %111 = vmatpush2.msra.mxu0 0.0
  %112 = vmatprep.subr.mxu0 0.0
  %113 = vmatpush2.msra.mxu0 0.0
  %114 = vmatprep.subr.mxu0 0.0
  %115 = vmatpush2.msra.mxu0 0.0
  %116 = vmatprep.subr.mxu0 0.0
  %117 = vmatpush2.msra.mxu0 0.0
  %118 = vmatprep.subr.mxu0 0.0
  %119 = vmatpush2.msra.mxu0 0.0
  %120 = vmatprep.subr.mxu0 0.0
  %121 = vmatpush2.msra.mxu0 0.0
  %122 = vmatprep.subr.mxu0 0.0
  %123 = vmatpush2.msra.mxu0 0.0
  %124 = vmatprep.subr.mxu0 0.0
  %125 = vmatpush2.msra.mxu0 0.0
  %126 = vmatprep.subr.mxu0 0.0
  %127 = vmatpush2.msra.mxu0 0.0
  %128 = vmatprep.mubr.f32.mxu0 0.0
  %129 = vmatmul.mubr.f32.gmra.mxu0 %v41
  %v130 = vpop.f32.mrf.mxu0
  %v131 = vadd.f32 0.0, %v130
  %v132 = vpop.f32.mrf.mxu0
  %133 = vmatprep.mubr.f32.mxu0 0.0
  %134 = vmatmul.mubr.f32.gmra.mxu0 %v44
  %v135 = vpop.f32.mrf.mxu0
  %v136 = vadd.f32 0.0, %v135
  %v137 = vpop.f32.mrf.mxu0
  %138 = vmatprep.mubr.f32.mxu0 0.0
  %139 = vmatmul.mubr.f32.gmra.mxu0 %v47
  %v140 = vpop.f32.mrf.mxu0
  %v141 = vadd.f32 0.0, %v140
  %v142 = vpop.f32.mrf.mxu0
  %143 = vmatprep.mubr.f32.mxu0 0.0
  %144 = vmatmul.mubr.f32.gmra.mxu0 %v50
  %v145 = vpop.f32.mrf.mxu0
  %v146 = vadd.f32 0.0, %v145
  %v147 = vpop.f32.mrf.mxu0
  %148 = vmatprep.mubr.f32.mxu0 0.0
  %149 = vmatmul.mubr.f32.gmra.mxu0 %v53
  %v150 = vpop.f32.mrf.mxu0
  %v151 = vadd.f32 0.0, %v150
  %v152 = vpop.f32.mrf.mxu0
  %153 = vmatprep.mubr.f32.mxu0 0.0
  %154 = vmatmul.mubr.f32.gmra.mxu0 %v56
  %v155 = vpop.f32.mrf.mxu0
  %v156 = vadd.f32 0.0, %v155
  %v157 = vpop.f32.mrf.mxu0
  %158 = vmatprep.mubr.f32.mxu0 0.0
  %159 = vmatmul.mubr.f32.gmra.mxu0 %v59
  %v160 = vpop.f32.mrf.mxu0
  %v161 = vadd.f32 0.0, %v160
  %v162 = vpop.f32.mrf.mxu0
  %163 = vmatprep.mubr.f32.mxu0 0.0
  %164 = vmatmul.mubr.f32.gmra.mxu0 %v62
  %v165 = vpop.f32.mrf.mxu0
  %v166 = vadd.f32 0.0, %v165
  %v167 = vpop.f32.mrf.mxu0
  %168 = vdwg.mxu0
  %v169 = vld [vmem:[%s2] sm:$0xff]
  %v170 = vld [vmem:[%s2 + $0x8] sm:$0xff]
  %v171 = vld [vmem:[%s3] sm:$0x1]
  %v172 = vlaneseq
  %v173 = vshrl.u32 %v172, 7
  %v174 = vsub.s32 0, %v173
  %v175 = vrot.slane %v171, %v174
  %vm176 = vcmask 130048
  %v178 = vsel %vm176, %v131, 0
  %v181 = vsel %vm176, %v136, 0
  %v184 = vsel %vm176, %v141, 0
  %v187 = vsel %vm176, %v146, 0
  %v190 = vsel %vm176, %v151, 0
  %v193 = vsel %vm176, %v156, 0
  %v196 = vsel %vm176, %v161, 0
  %v199 = vsel %vm176, %v166, 0
  %201 = vmatprep.subr.mxu0 0.0
  %202 = vmatpush1.msra.mxu0 0.0
  %203 = vmatprep.subr.mxu0 0.0
  %204 = vmatpush1.msra.mxu0 0.0
  %205 = vmatprep.subr.mxu0 0.0
  %206 = vmatpush1.msra.mxu0 0.0
  %207 = vmatprep.subr.mxu0 0.0
  %208 = vmatpush1.msra.mxu0 0.0
  %209 = vmatprep.subr.mxu0 0.0
  %210 = vmatpush1.msra.mxu0 0.0
  %211 = vmatprep.subr.mxu0 0.0
  %212 = vmatpush1.msra.mxu0 0.0
  %213 = vmatprep.subr.mxu0 0.0
  %214 = vmatpush1.msra.mxu0 0.0
  %215 = vmatprep.subr.mxu0 0.0
  %216 = vmatpush1.msra.mxu0 0.0
  %217 = vmatprep.subr.mxu0 0.0
  %218 = vmatpush1.msra.mxu0 0.0
  %219 = vmatprep.subr.mxu0 0.0
  %220 = vmatpush1.msra.mxu0 0.0
  %221 = vmatprep.subr.mxu0 0.0
  %222 = vmatpush1.msra.mxu0 0.0
  %223 = vmatprep.subr.mxu0 0.0
  %224 = vmatpush1.msra.mxu0 0.0
  %225 = vmatprep.subr.mxu0 0.0
  %226 = vmatpush1.msra.mxu0 0.0
  %227 = vmatprep.subr.mxu0 0.0
  %228 = vmatpush1.msra.mxu0 0.0
  %229 = vmatprep.subr.mxu0 0.0
  %230 = vmatpush1.msra.mxu0 %v170
  %231 = vmatprep.subr.mxu0 0.0
  %232 = vmatpush1.msra.mxu0 %v169
  %233 = vmatprep.subr.mxu0 0.0
  %234 = vmatpush2.msra.mxu0 0.0
  %235 = vmatprep.subr.mxu0 0.0
  %236 = vmatpush2.msra.mxu0 0.0
  %237 = vmatprep.subr.mxu0 0.0
  %238 = vmatpush2.msra.mxu0 0.0
  %239 = vmatprep.subr.mxu0 0.0
  %240 = vmatpush2.msra.mxu0 0.0
  %241 = vmatprep.subr.mxu0 0.0
  %242 = vmatpush2.msra.mxu0 0.0
  %243 = vmatprep.subr.mxu0 0.0
  %244 = vmatpush2.msra.mxu0 0.0
  %245 = vmatprep.subr.mxu0 0.0
  %246 = vmatpush2.msra.mxu0 0.0
  %247 = vmatprep.subr.mxu0 0.0
  %248 = vmatpush2.msra.mxu0 0.0
  %249 = vmatprep.subr.mxu0 0.0
  %250 = vmatpush2.msra.mxu0 0.0
  %251 = vmatprep.subr.mxu0 0.0
  %252 = vmatpush2.msra.mxu0 0.0
  %253 = vmatprep.subr.mxu0 0.0
  %254 = vmatpush2.msra.mxu0 0.0
  %255 = vmatprep.subr.mxu0 0.0
  %256 = vmatpush2.msra.mxu0 0.0
  %257 = vmatprep.subr.mxu0 0.0
  %258 = vmatpush2.msra.mxu0 0.0
  %259 = vmatprep.subr.mxu0 0.0
  %260 = vmatpush2.msra.mxu0 0.0
  %261 = vmatprep.subr.mxu0 0.0
  %262 = vmatpush2.msra.mxu0 0.0
  %263 = vmatprep.subr.mxu0 0.0
  %264 = vmatpush2.msra.mxu0 0.0
  %265 = vmatprep.mubr.f32.mxu0 0.0
  %266 = vmatmul.mubr.f32.gmra.mxu0 %v178
  %v267 = vpop.f32.mrf.mxu0
  %v268 = vadd.f32 %v175, %v267
  %v269 = vpop.f32.mrf.mxu0
  %270 = vmatprep.mubr.f32.mxu0 0.0
  %271 = vmatmul.mubr.f32.gmra.mxu0 %v181
  %v272 = vpop.f32.mrf.mxu0
  %v273 = vadd.f32 %v175, %v272
  %v274 = vpop.f32.mrf.mxu0
  %275 = vmatprep.mubr.f32.mxu0 0.0
  %276 = vmatmul.mubr.f32.gmra.mxu0 %v184
  %v277 = vpop.f32.mrf.mxu0
  %v278 = vadd.f32 %v175, %v277
  %v279 = vpop.f32.mrf.mxu0
  %280 = vmatprep.mubr.f32.mxu0 0.0
  %281 = vmatmul.mubr.f32.gmra.mxu0 %v187
  %v282 = vpop.f32.mrf.mxu0
  %v283 = vadd.f32 %v175, %v282
  %v284 = vpop.f32.mrf.mxu0
  %285 = vmatprep.mubr.f32.mxu0 0.0
  %286 = vmatmul.mubr.f32.gmra.mxu0 %v190
  %v287 = vpop.f32.mrf.mxu0
  %v288 = vadd.f32 %v175, %v287
  %v289 = vpop.f32.mrf.mxu0
  %290 = vmatprep.mubr.f32.mxu0 0.0
  %291 = vmatmul.mubr.f32.gmra.mxu0 %v193
  %v292 = vpop.f32.mrf.mxu0
  %v293 = vadd.f32 %v175, %v292
  %v294 = vpop.f32.mrf.mxu0
  %295 = vmatprep.mubr.f32.mxu0 0.0
  %296 = vmatmul.mubr.f32.gmra.mxu0 %v196
  %v297 = vpop.f32.mrf.mxu0
  %v298 = vadd.f32 %v175, %v297
  %v299 = vpop.f32.mrf.mxu0
  %300 = vmatprep.mubr.f32.mxu0 0.0
  %301 = vmatmul.mubr.f32.gmra.mxu0 %v199
  %v302 = vpop.f32.mrf.mxu0
  %v303 = vadd.f32 %v175, %v302
  %v304 = vpop.f32.mrf.mxu0
  %305 = vdwg.mxu0
  %v306 = vmax.f32 %v268, 0.0
  %v307 = vmax.f32 %v273, 0.0
  %v308 = vmax.f32 %v278, 0.0
  %v309 = vmax.f32 %v283, 0.0
  %v310 = vmax.f32 %v288, 0.0
  %v311 = vmax.f32 %v293, 0.0
  %v312 = vmax.f32 %v298, 0.0
  %v313 = vmax.f32 %v303, 0.0
  %v314 = vld [vmem:[%s3 + $0x1] sm:$0x1]
  %v315 = vlaneseq
  %v316 = vshrl.u32 %v315, 7
  %v317 = vsub.s32 0, %v316
  %v318 = vrot.slane %v314, %v317
  %v319 = vmul.f32 %v306, %v318
  %v320 = vmul.f32 %v307, %v318
  %v321 = vmul.f32 %v308, %v318
  %v322 = vmul.f32 %v309, %v318
  %v323 = vmul.f32 %v310, %v318
  %v324 = vmul.f32 %v311, %v318
  %v325 = vmul.f32 %v312, %v318
  %v326 = vmul.f32 %v313, %v318
  %v327 = vld [vmem:[%s3 + $0x2] sm:$0x1]
  %v328 = vlaneseq
  %v329 = vshrl.u32 %v328, 7
  %v330 = vsub.s32 0, %v329
  %v331 = vrot.slane %v327, %v330
  %v332 = vadd.f32 %v319, %v331
  %v333 = vadd.f32 %v320, %v331
  %v334 = vadd.f32 %v321, %v331
  %v335 = vadd.f32 %v322, %v331
  %v336 = vadd.f32 %v323, %v331
  %v337 = vadd.f32 %v324, %v331
  %v338 = vadd.f32 %v325, %v331
  %v339 = vadd.f32 %v326, %v331
  %v340 = vld [vmem:[%s4] sm:$0xff]
  %v341 = vld [vmem:[%s4 + $0x8] sm:$0xff]
  %v342 = vld [vmem:[%s4 + $0x10] sm:$0xff]
  %v343 = vld [vmem:[%s4 + $0x18] sm:$0xff]
  %vm344 = vcmask 261120
  %v346 = vsel %vm344, %v332, 0
  %v349 = vsel %vm344, %v333, 0
  %v352 = vsel %vm344, %v334, 0
  %v355 = vsel %vm344, %v335, 0
  %v358 = vsel %vm344, %v336, 0
  %v361 = vsel %vm344, %v337, 0
  %v364 = vsel %vm344, %v338, 0
  %v367 = vsel %vm344, %v339, 0
  %369 = vmatprep.subr.mxu0 0.0
  %370 = vmatpush1.msra.mxu0 0.0
  %371 = vmatprep.subr.mxu0 0.0
  %372 = vmatpush1.msra.mxu0 0.0
  %373 = vmatprep.subr.mxu0 0.0
  %374 = vmatpush1.msra.mxu0 0.0
  %375 = vmatprep.subr.mxu0 0.0
  %376 = vmatpush1.msra.mxu0 0.0
  %377 = vmatprep.subr.mxu0 0.0
  %378 = vmatpush1.msra.mxu0 0.0
  %379 = vmatprep.subr.mxu0 0.0
  %380 = vmatpush1.msra.mxu0 0.0
  %381 = vmatprep.subr.mxu0 0.0
  %382 = vmatpush1.msra.mxu0 0.0
  %383 = vmatprep.subr.mxu0 0.0
  %384 = vmatpush1.msra.mxu0 0.0
  %385 = vmatprep.subr.mxu0 0.0
  %386 = vmatpush1.msra.mxu0 0.0
  %387 = vmatprep.subr.mxu0 0.0
  %388 = vmatpush1.msra.mxu0 0.0
  %389 = vmatprep.subr.mxu0 0.0
  %390 = vmatpush1.msra.mxu0 0.0
  %391 = vmatprep.subr.mxu0 0.0
  %392 = vmatpush1.msra.mxu0 0.0
  %393 = vmatprep.subr.mxu0 0.0
  %394 = vmatpush1.msra.mxu0 %v343
  %395 = vmatprep.subr.mxu0 0.0
  %396 = vmatpush1.msra.mxu0 %v342
  %397 = vmatprep.subr.mxu0 0.0
  %398 = vmatpush1.msra.mxu0 %v341
  %399 = vmatprep.subr.mxu0 0.0
  %400 = vmatpush1.msra.mxu0 %v340
  %401 = vmatprep.subr.mxu0 0.0
  %402 = vmatpush2.msra.mxu0 0.0
  %403 = vmatprep.subr.mxu0 0.0
  %404 = vmatpush2.msra.mxu0 0.0
  %405 = vmatprep.subr.mxu0 0.0
  %406 = vmatpush2.msra.mxu0 0.0
  %407 = vmatprep.subr.mxu0 0.0
  %408 = vmatpush2.msra.mxu0 0.0
  %409 = vmatprep.subr.mxu0 0.0
  %410 = vmatpush2.msra.mxu0 0.0
  %411 = vmatprep.subr.mxu0 0.0
  %412 = vmatpush2.msra.mxu0 0.0
  %413 = vmatprep.subr.mxu0 0.0
  %414 = vmatpush2.msra.mxu0 0.0
  %415 = vmatprep.subr.mxu0 0.0
  %416 = vmatpush2.msra.mxu0 0.0
  %417 = vmatprep.subr.mxu0 0.0
  %418 = vmatpush2.msra.mxu0 0.0
  %419 = vmatprep.subr.mxu0 0.0
  %420 = vmatpush2.msra.mxu0 0.0
  %421 = vmatprep.subr.mxu0 0.0
  %422 = vmatpush2.msra.mxu0 0.0
  %423 = vmatprep.subr.mxu0 0.0
  %424 = vmatpush2.msra.mxu0 0.0
  %425 = vmatprep.subr.mxu0 0.0
  %426 = vmatpush2.msra.mxu0 0.0
  %427 = vmatprep.subr.mxu0 0.0
  %428 = vmatpush2.msra.mxu0 0.0
  %429 = vmatprep.subr.mxu0 0.0
  %430 = vmatpush2.msra.mxu0 0.0
  %431 = vmatprep.subr.mxu0 0.0
  %432 = vmatpush2.msra.mxu0 0.0
  %433 = vmatprep.mubr.f32.mxu0 0.0
  %434 = vmatmul.mubr.f32.gmra.mxu0 %v346
  %v435 = vpop.f32.mrf.mxu0
  %v436 = vadd.f32 0.0, %v435
  %v437 = vpop.f32.mrf.mxu0
  %438 = vmatprep.mubr.f32.mxu0 0.0
  %439 = vmatmul.mubr.f32.gmra.mxu0 %v349
  %v440 = vpop.f32.mrf.mxu0
  %v441 = vadd.f32 0.0, %v440
  %v442 = vpop.f32.mrf.mxu0
  %443 = vmatprep.mubr.f32.mxu0 0.0
  %444 = vmatmul.mubr.f32.gmra.mxu0 %v352
  %v445 = vpop.f32.mrf.mxu0
  %v446 = vadd.f32 0.0, %v445
  %v447 = vpop.f32.mrf.mxu0
  %448 = vmatprep.mubr.f32.mxu0 0.0
  %449 = vmatmul.mubr.f32.gmra.mxu0 %v355
  %v450 = vpop.f32.mrf.mxu0
  %v451 = vadd.f32 0.0, %v450
  %v452 = vpop.f32.mrf.mxu0
  %453 = vmatprep.mubr.f32.mxu0 0.0
  %454 = vmatmul.mubr.f32.gmra.mxu0 %v358
  %v455 = vpop.f32.mrf.mxu0
  %v456 = vadd.f32 0.0, %v455
  %v457 = vpop.f32.mrf.mxu0
  %458 = vmatprep.mubr.f32.mxu0 0.0
  %459 = vmatmul.mubr.f32.gmra.mxu0 %v361
  %v460 = vpop.f32.mrf.mxu0
  %v461 = vadd.f32 0.0, %v460
  %v462 = vpop.f32.mrf.mxu0
  %463 = vmatprep.mubr.f32.mxu0 0.0
  %464 = vmatmul.mubr.f32.gmra.mxu0 %v364
  %v465 = vpop.f32.mrf.mxu0
  %v466 = vadd.f32 0.0, %v465
  %v467 = vpop.f32.mrf.mxu0
  %468 = vmatprep.mubr.f32.mxu0 0.0
  %469 = vmatmul.mubr.f32.gmra.mxu0 %v367
  %v470 = vpop.f32.mrf.mxu0
  %v471 = vadd.f32 0.0, %v470
  %v472 = vpop.f32.mrf.mxu0
  %473 = vdwg.mxu0
  %v474 = vld [vmem:[%s5] sm:$0x1]
  %v475 = vlaneseq
  %v476 = vshrl.u32 %v475, 7
  %v477 = vsub.s32 0, %v476
  %v478 = vrot.slane %v474, %v477
  %479 = vmatprep.subr.mxu0 0.0
  %480 = vmatpush1.msra.mxu0 0.0
  %481 = vmatprep.subr.mxu0 0.0
  %482 = vmatpush1.msra.mxu0 0.0
  %483 = vmatprep.subr.mxu0 0.0
  %484 = vmatpush1.msra.mxu0 0.0
  %485 = vmatprep.subr.mxu0 0.0
  %486 = vmatpush1.msra.mxu0 0.0
  %487 = vmatprep.subr.mxu0 0.0
  %488 = vmatpush1.msra.mxu0 0.0
  %489 = vmatprep.subr.mxu0 0.0
  %490 = vmatpush1.msra.mxu0 0.0
  %491 = vmatprep.subr.mxu0 0.0
  %492 = vmatpush1.msra.mxu0 0.0
  %493 = vmatprep.subr.mxu0 0.0
  %494 = vmatpush1.msra.mxu0 0.0
  %495 = vmatprep.subr.mxu0 0.0
  %496 = vmatpush1.msra.mxu0 %v471
  %497 = vmatprep.subr.mxu0 0.0
  %498 = vmatpush1.msra.mxu0 %v466
  %499 = vmatprep.subr.mxu0 0.0
  %500 = vmatpush1.msra.mxu0 %v461
  %501 = vmatprep.subr.mxu0 0.0
  %502 = vmatpush1.msra.mxu0 %v456
  %503 = vmatprep.subr.mxu0 0.0
  %504 = vmatpush1.msra.mxu0 %v451
  %505 = vmatprep.subr.mxu0 0.0
  %506 = vmatpush1.msra.mxu0 %v446
  %507 = vmatprep.subr.mxu0 0.0
  %508 = vmatpush1.msra.mxu0 %v441
  %509 = vmatprep.subr.mxu0 0.0
  %510 = vmatpush1.msra.mxu0 %v436
  %511 = vmatprep.subr.mxu0 0.0
  %512 = vmatpush2.msra.mxu0 0.0
  %513 = vmatprep.subr.mxu0 0.0
  %514 = vmatpush2.msra.mxu0 0.0
  %515 = vmatprep.subr.mxu0 0.0
  %516 = vmatpush2.msra.mxu0 0.0
  %517 = vmatprep.subr.mxu0 0.0
  %518 = vmatpush2.msra.mxu0 0.0
  %519 = vmatprep.subr.mxu0 0.0
  %520 = vmatpush2.msra.mxu0 0.0
  %521 = vmatprep.subr.mxu0 0.0
  %522 = vmatpush2.msra.mxu0 0.0
  %523 = vmatprep.subr.mxu0 0.0
  %524 = vmatpush2.msra.mxu0 0.0
  %525 = vmatprep.subr.mxu0 0.0
  %526 = vmatpush2.msra.mxu0 0.0
  %527 = vmatprep.subr.mxu0 0.0
  %528 = vmatpush2.msra.mxu0 0.0
  %529 = vmatprep.subr.mxu0 0.0
  %530 = vmatpush2.msra.mxu0 0.0
  %531 = vmatprep.subr.mxu0 0.0
  %532 = vmatpush2.msra.mxu0 0.0
  %533 = vmatprep.subr.mxu0 0.0
  %534 = vmatpush2.msra.mxu0 0.0
  %535 = vmatprep.subr.mxu0 0.0
  %536 = vmatpush2.msra.mxu0 0.0
  %537 = vmatprep.subr.mxu0 0.0
  %538 = vmatpush2.msra.mxu0 0.0
  %539 = vmatprep.subr.mxu0 0.0
  %540 = vmatpush2.msra.mxu0 0.0
  %541 = vmatprep.subr.mxu0 0.0
  %542 = vmatpush2.msra.mxu0 0.0
  %543 = vmatprep.mubr.f32.mxu0 0.0
  %544 = vmatmul.mubr.f32.gmra.mxu0 %v41
  %v545 = vpop.f32.mrf.mxu0
  %v546 = vadd.f32 %v478, %v545
  %v547 = vpop.f32.mrf.mxu0
  %548 = vmatprep.mubr.f32.mxu0 0.0
  %549 = vmatmul.mubr.f32.gmra.mxu0 %v44
  %v550 = vpop.f32.mrf.mxu0
  %v551 = vadd.f32 %v478, %v550
  %v552 = vpop.f32.mrf.mxu0
  %553 = vmatprep.mubr.f32.mxu0 0.0
  %554 = vmatmul.mubr.f32.gmra.mxu0 %v47
  %v555 = vpop.f32.mrf.mxu0
  %v556 = vadd.f32 %v478, %v555
  %v557 = vpop.f32.mrf.mxu0
  %558 = vmatprep.mubr.f32.mxu0 0.0
  %559 = vmatmul.mubr.f32.gmra.mxu0 %v50
  %v560 = vpop.f32.mrf.mxu0
  %v561 = vadd.f32 %v478, %v560
  %v562 = vpop.f32.mrf.mxu0
  %563 = vmatprep.mubr.f32.mxu0 0.0
  %564 = vmatmul.mubr.f32.gmra.mxu0 %v53
  %v565 = vpop.f32.mrf.mxu0
  %v566 = vadd.f32 %v478, %v565
  %v567 = vpop.f32.mrf.mxu0
  %568 = vmatprep.mubr.f32.mxu0 0.0
  %569 = vmatmul.mubr.f32.gmra.mxu0 %v56
  %v570 = vpop.f32.mrf.mxu0
  %v571 = vadd.f32 %v478, %v570
  %v572 = vpop.f32.mrf.mxu0
  %573 = vmatprep.mubr.f32.mxu0 0.0
  %574 = vmatmul.mubr.f32.gmra.mxu0 %v59
  %v575 = vpop.f32.mrf.mxu0
  %v576 = vadd.f32 %v478, %v575
  %v577 = vpop.f32.mrf.mxu0
  %578 = vmatprep.mubr.f32.mxu0 0.0
  %579 = vmatmul.mubr.f32.gmra.mxu0 %v62
  %v580 = vpop.f32.mrf.mxu0
  %v581 = vadd.f32 %v478, %v580
  %v582 = vpop.f32.mrf.mxu0
  %583 = vdwg.mxu0
  %v584 = vmax.f32 %v546, 0.0
  %v585 = vmax.f32 %v551, 0.0
  %v586 = vmax.f32 %v556, 0.0
  %v587 = vmax.f32 %v561, 0.0
  %v588 = vmax.f32 %v566, 0.0
  %v589 = vmax.f32 %v571, 0.0
  %v590 = vmax.f32 %v576, 0.0
  %v591 = vmax.f32 %v581, 0.0
  %v592 = vld [vmem:[%s5 + $0x1] sm:$0x1]
  %v593 = vlaneseq
  %v594 = vshrl.u32 %v593, 7
  %v595 = vsub.s32 0, %v594
  %v596 = vrot.slane %v592, %v595
  %v597 = vmul.f32 %v584, %v596
  %v598 = vmul.f32 %v585, %v596
  %v599 = vmul.f32 %v586, %v596
  %v600 = vmul.f32 %v587, %v596
  %v601 = vmul.f32 %v588, %v596
  %v602 = vmul.f32 %v589, %v596
  %v603 = vmul.f32 %v590, %v596
  %v604 = vmul.f32 %v591, %v596
  %v605 = vld [vmem:[%s5 + $0x2] sm:$0x1]
  %v606 = vlaneseq
  %v607 = vshrl.u32 %v606, 7
  %v608 = vsub.s32 0, %v607
  %v609 = vrot.slane %v605, %v608
  %v610 = vadd.f32 %v597, %v609
  %v611 = vadd.f32 %v598, %v609
  %v612 = vadd.f32 %v599, %v609
  %v613 = vadd.f32 %v600, %v609
  %v614 = vadd.f32 %v601, %v609
  %v615 = vadd.f32 %v602, %v609
  %v616 = vadd.f32 %v603, %v609
  %v617 = vadd.f32 %v604, %v609
  %618 = vst.msk [vmem:[%s6] sm:$0xff] %vm176, %v610
  %619 = vst.msk [vmem:[%s6 + $0x8] sm:$0xff] %vm176, %v611
  %620 = vst.msk [vmem:[%s6 + $0x10] sm:$0xff] %vm176, %v612
  %621 = vst.msk [vmem:[%s6 + $0x18] sm:$0xff] %vm176, %v613
  %622 = vst.msk [vmem:[%s6 + $0x20] sm:$0xff] %vm176, %v614
  %623 = vst.msk [vmem:[%s6 + $0x28] sm:$0xff] %vm176, %v615
  %624 = vst.msk [vmem:[%s6 + $0x30] sm:$0xff] %vm176, %v616
  %625 = vst.msk [vmem:[%s6 + $0x38] sm:$0xff] %vm176, %v617
  // Predicated region
  $region26: #{gnn_forward.1} parent=0 // pred_check
    _
  $region27: #{gnn_forward.1} parent=0 // pred_check_branch
    %627 = sbr.rel (0) target = $region29
  $region28: #{gnn_forward.1} parent=0 // pred_region
    _
  $region29: #{gnn_forward.1} parent=0 // pred_fallthru
    _
  // Predicated region
  $region30: #{gnn_forward.1} parent=0 // pred_check
    _
  $region31: #{gnn_forward.1} parent=0 // pred_check_branch
    %629 = sbr.rel (0) target = $region33
  $region32: #{gnn_forward.1} parent=0 // pred_region
    _
  $region33: #{gnn_forward.1} parent=0 // pred_fallthru
    _

</llo_original>
